<compile_context>
chip_gen: v7x
topology: tpu7x:2x2x1
jax: 0.10.0
libtpu: 0.0.40
codegen_flags: <defaults>
</compile_context>

<pallas_src>
import functools

import jax
import jax.numpy as jnp
from jax.experimental import pallas as pl
from jax.experimental.pallas import tpu as pltpu


# ---------------------------------------------------------------------------
# Model hyper-parameters (consistent with the module's __init__ defaults)
# ---------------------------------------------------------------------------
INPUT_DIM = 12
NUM_LAUNCHES = 8
LAUNCH_EMB_DIM = 4
NUM_TARGETS = 3
DEEP_HIDDEN = (64, 32)
CROSS_LAYERS = 2

COMBINED_DIM = INPUT_DIM + LAUNCH_EMB_DIM          # D  = 16
H1, H2 = DEEP_HIDDEN                               # 64, 32
FINAL_DIM = H2 + COMBINED_DIM                      # 48 (torch concat: cross, deep)

_MAX_TILE = 8192                                   # ~15 MiB/step incl. scratch
_VMEM_LIMIT = 32 * 1024 * 1024

# dot_general dimension numbers for "A @ B^T" (contract both last dims).
_TRANS_B = (((1,), (1,)), ((), ()))


# ---------------------------------------------------------------------------
# Pallas kernel: one batch tile end-to-end, batch on the lane axis
# ---------------------------------------------------------------------------
def _glideator_kernel(
    feat_ref,   # (TB, 12) f32  natural-layout feature block
    ids_ref,    # (1, TB)  i32  launch ids (lane-dense)
    pe_ref,     # (16, 22) f32  [:, :12]=proj [I12;0], [:,12:20]=emb^T pad, [:,20:22]=cross_b^T
    cw_ref,     # (L, 16)  f32  cross weights (row l)
    w1_ref,     # (64, 16) f32
    w2_ref,     # (32, 64) f32
    wo_ref,     # (3, 48)  f32  output head (torch order: cross cols then deep cols)
    bias_ref,   # (64, 3)  f32  col0=b1, col1=b2 (rows :32), col2=bo (rows :3)
    out_ref,    # (3, TB)  f32
):
    feat = feat_ref[...]                                              # (TB, 12)
    ids = ids_ref[...]                                                # (1, TB)
    tb = feat.shape[0]

    pe = pe_ref[...]                                                  # (16, 22)
    proj = pe[:, :INPUT_DIM]                                          # (16, 12)
    embp = pe[:, INPUT_DIM:INPUT_DIM + NUM_LAUNCHES]                  # (16, 8)
    cb = pe[:, INPUT_DIM + NUM_LAUNCHES:]                             # (16, 2)

    # Flip batch from sublanes to lanes via an MXU rhs-transposed matmul:
    #   featT[d, b] = sum_k proj[d, k] * feat[b, k]   -> (16, TB), rows 12: = 0
    feat_t = jax.lax.dot_general(proj, feat, _TRANS_B,
                                 preferred_element_type=jnp.float32)  # (16, TB)

    # Fused embedding lookup: one-hot(ids) matmul against the VMEM-resident table.
    iota = jax.lax.broadcasted_iota(jnp.int32, (NUM_LAUNCHES, tb), 0)
    onehot = (iota == ids).astype(jnp.float32)                        # (8, TB)
    x0 = feat_t + jnp.dot(embp, onehot,
                          preferred_element_type=jnp.float32)         # (16, TB)

    # Cross network: x_{l+1} = x0 * (w_l . x_l) + b_l + x_l
    cw = cw_ref[...]                                                  # (L, 16)
    x = x0
    for l in range(CROSS_LAYERS):
        xw = jnp.dot(cw[l:l + 1, :], x,
                     preferred_element_type=jnp.float32)              # (1, TB)
        x = x0 * xw + cb[:, l:l + 1] + x
    cross_out = x                                                     # (16, TB)

    # Deep network: Linear -> ReLU -> Linear -> ReLU
    bias = bias_ref[...]                                              # (64, 3)
    h = jnp.dot(w1_ref[...], x0, preferred_element_type=jnp.float32) + bias[:, 0:1]
    h = jnp.maximum(h, 0.0)
    h = jnp.dot(w2_ref[...], h, preferred_element_type=jnp.float32) + bias[:H2, 1:2]
    deep_out = jnp.maximum(h, 0.0)                                    # (32, TB)

    # Output heads: sigmoid(Wo @ concat([cross_out, deep_out]) + bo)
    wo = wo_ref[...]                                                  # (3, 48)
    logits = (
        jnp.dot(wo[:, :COMBINED_DIM], cross_out, preferred_element_type=jnp.float32)
        + jnp.dot(wo[:, COMBINED_DIM:], deep_out, preferred_element_type=jnp.float32)
        + bias[:NUM_TARGETS, 2:3]
    )                                                                 # (3, TB)
    out_ref[...] = jax.nn.sigmoid(logits).astype(out_ref.dtype)       # lane-dense store


# ---------------------------------------------------------------------------
# Tiling helpers
# ---------------------------------------------------------------------------
def _round_up(x, m):
    return (x + m - 1) // m * m


def _auto_batch_tile(batch):
    """Lane-aligned tile.  Small batches: one tile (latency path).  Large
    batches: tile multiple of 256, capped at 8192, chosen so the number of
    grid steps is even and >= 2 (keeps both v7x TensorCores loaded; on
    v5e/v6e the grid is a serial loop and only tile size matters)."""
    if batch <= 1024:
        return max(128, _round_up(batch, 128))
    n_steps = max(2, 2 * pl.cdiv(batch, 2 * _MAX_TILE))
    return int(min(_MAX_TILE, _round_up(pl.cdiv(batch, n_steps), 256)))


# ---------------------------------------------------------------------------
# Wrapper
# ---------------------------------------------------------------------------
@functools.partial(jax.jit, static_argnames=("batch_tile",))
def glideator_forward(features, launch_ids, params, *, batch_tile=None):
    """features: (B, INPUT_DIM); launch_ids: (B,) int -> (B, NUM_TARGETS) f32."""
    B = features.shape[0]
    if batch_tile is None:
        batch_tile = _auto_batch_tile(B)
    else:
        # Lane constraint: tiled BlockSpecs need a multiple of 128 columns.
        batch_tile = max(128, _round_up(int(batch_tile), 128))
    n_tiles = pl.cdiv(B, batch_tile)
    pad_b = n_tiles * batch_tile

    # Inputs stay in their natural layout; only the ragged tail (if any) is
    # zero-padded (XLA elides the pad when pad_b == B).  Padded tail columns
    # produce garbage that is sliced off below.
    feat = jnp.pad(features.astype(jnp.float32), ((0, pad_b - B), (0, 0)))
    ids_row = jnp.pad(launch_ids.astype(jnp.int32).reshape(1, B),
                      ((0, 0), (0, pad_b - B)))

    # Tiny one-time parameter re-layouts / fusions (stay VMEM-resident).
    pe = jnp.zeros((COMBINED_DIM, INPUT_DIM + NUM_LAUNCHES + CROSS_LAYERS), jnp.float32)
    pe = pe.at[:INPUT_DIM, :INPUT_DIM].set(jnp.eye(INPUT_DIM, dtype=jnp.float32))
    pe = pe.at[INPUT_DIM:, INPUT_DIM:INPUT_DIM + NUM_LAUNCHES].set(params["embedding"].T)
    pe = pe.at[:, INPUT_DIM + NUM_LAUNCHES:].set(params["cross_b"].T)

    bias = jnp.zeros((H1, 3), jnp.float32)
    bias = bias.at[:, 0].set(params["b1"])
    bias = bias.at[:H2, 1].set(params["b2"])
    bias = bias.at[:NUM_TARGETS, 2].set(params["bo"])

    row_tiled = pl.BlockSpec((batch_tile, INPUT_DIM), lambda i: (i, 0))
    col_tiled = lambda rows: pl.BlockSpec((rows, batch_tile), lambda i: (0, i))
    full = lambda shape: pl.BlockSpec(shape, lambda i: (0, 0))

    out_t = pl.pallas_call(
        _glideator_kernel,
        out_shape=jax.ShapeDtypeStruct((NUM_TARGETS, pad_b), jnp.float32),
        grid_spec=pltpu.PrefetchScalarGridSpec(
            num_scalar_prefetch=0,
            grid=(n_tiles,),
            in_specs=[
                row_tiled,                                       # features (TB, 12)
                col_tiled(1),                                    # launch ids (1, TB)
                full((COMBINED_DIM, INPUT_DIM + NUM_LAUNCHES + CROSS_LAYERS)),
                full((CROSS_LAYERS, COMBINED_DIM)),              # cross W
                full((H1, COMBINED_DIM)),                        # W1
                full((H2, H1)),                                  # W2
                full((NUM_TARGETS, FINAL_DIM)),                  # Wo
                full((H1, 3)),                                   # fused biases
            ],
            out_specs=pl.BlockSpec((NUM_TARGETS, batch_tile), lambda i: (0, i)),
        ),
        compiler_params=pltpu.CompilerParams(
            dimension_semantics=("parallel",),
            vmem_limit_bytes=_VMEM_LIMIT,
        ),
    )(feat, ids_row, pe, params["cross_w"], params["w1"], params["w2"],
      params["wo"], bias)

    # Drop padded columns (they hold garbage from launch_id 0 / zero features).
    return out_t[:, :B].T


# ---------------------------------------------------------------------------
# Deterministic parameter initialization (torch-style (out, in) weight layout)
# ---------------------------------------------------------------------------
def init_params(key):
    ks = jax.random.split(key, 8)
    scale = 0.1
    return {
        "embedding": scale * jax.random.normal(ks[0], (NUM_LAUNCHES, LAUNCH_EMB_DIM), jnp.float32),
        "cross_w": scale * jax.random.normal(ks[1], (CROSS_LAYERS, COMBINED_DIM), jnp.float32),
        "cross_b": scale * jax.random.normal(ks[2], (CROSS_LAYERS, COMBINED_DIM), jnp.float32),
        "w1": scale * jax.random.normal(ks[3], (H1, COMBINED_DIM), jnp.float32),
        "b1": jnp.zeros((H1,), jnp.float32),
        "w2": scale * jax.random.normal(ks[4], (H2, H1), jnp.float32),
        "b2": jnp.zeros((H2,), jnp.float32),
        "wo": scale * jax.random.normal(ks[5], (NUM_TARGETS, FINAL_DIM), jnp.float32),
        "bo": scale * jax.random.normal(ks[6], (NUM_TARGETS,), jnp.float32),
    }


# Pure-JAX reference for a sanity check.
def reference_forward(features, launch_ids, params):
    emb = params["embedding"][launch_ids]
    x0 = jnp.concatenate([features, emb], axis=-1).astype(jnp.float32)
    x = x0
    for l in range(CROSS_LAYERS):
        xw = jnp.sum(x * params["cross_w"][l][None, :], axis=-1, keepdims=True)
        x = x0 * xw + params["cross_b"][l][None, :] + x
    h = jnp.maximum(x0 @ params["w1"].T + params["b1"][None, :], 0.0)
    h = jnp.maximum(h @ params["w2"].T + params["b2"][None, :], 0.0)
    combined = jnp.concatenate([x, h], axis=-1)
    return jax.nn.sigmoid(combined @ params["wo"].T + params["bo"][None, :])


if __name__ == "__main__":
    key = jax.random.PRNGKey(0)
    k_feat, k_ids, k_params = jax.random.split(key, 3)
    params = init_params(k_params)

    # Small shape consistent with the module's forward (single-tile path).
    B = 8
    features = jax.random.normal(k_feat, (B, INPUT_DIM), jnp.float32)
    launch_ids = jax.random.randint(k_ids, (B,), 0, NUM_LAUNCHES, jnp.int32)
    out = jax.block_until_ready(glideator_forward(features, launch_ids, params))
    ref = reference_forward(features, launch_ids, params)
    assert out.shape == (B, NUM_TARGETS)
    assert jnp.allclose(out, ref, atol=1e-4, rtol=1e-4), (out, ref)

    # Multi-tile grid + ragged-batch (padding) path with an explicit small tile.
    B2 = 300
    f2 = jax.random.normal(k_feat, (B2, INPUT_DIM), jnp.float32)
    i2 = jax.random.randint(k_ids, (B2,), 0, NUM_LAUNCHES, jnp.int32)
    out2 = jax.block_until_ready(glideator_forward(f2, i2, params, batch_tile=128))
    ref2 = reference_forward(f2, i2, params)
    assert out2.shape == (B2, NUM_TARGETS)
    assert jnp.allclose(out2, ref2, atol=1e-4, rtol=1e-4)

    # Auto-tile large-batch path (even >=2-step "parallel" grid, ragged tail).
    B3 = 2500
    f3 = jax.random.normal(k_feat, (B3, INPUT_DIM), jnp.float32)
    i3 = jax.random.randint(k_ids, (B3,), 0, NUM_LAUNCHES, jnp.int32)
    out3 = jax.block_until_ready(glideator_forward(f3, i3, params))
    ref3 = reference_forward(f3, i3, params)
    assert out3.shape == (B3, NUM_TARGETS)
    assert jnp.allclose(out3, ref3, atol=1e-4, rtol=1e-4)

    print("KERNEL_OK")
</pallas_src>

<mosaic_0001>
module attributes {stable_mosaic.version = 11 : i64} {
  func.func @_glideator_kernel(%arg0: i32, %arg1: memref<128x12xf32, #tpu.memory_space<vmem>>, %arg2: memref<1x128xi32, #tpu.memory_space<vmem>>, %arg3: memref<16x22xf32, #tpu.memory_space<vmem>>, %arg4: memref<2x16xf32, #tpu.memory_space<vmem>>, %arg5: memref<64x16xf32, #tpu.memory_space<vmem>>, %arg6: memref<32x64xf32, #tpu.memory_space<vmem>>, %arg7: memref<3x48xf32, #tpu.memory_space<vmem>>, %arg8: memref<64x3xf32, #tpu.memory_space<vmem>>, %arg9: memref<3x128xf32, #tpu.memory_space<vmem>>) attributes {dimension_semantics = [#tpu.dimension_semantics<parallel>], iteration_bounds = array<i64: 1>, scalar_prefetch = 0 : i64, scratch_operands = 0 : i64, tpu.core_type = #tpu.core_type<tc>, window_params = [{transform_indices = @transform_0, window_bounds = array<i64: 128, 12>}, {transform_indices = @transform_1, window_bounds = array<i64: 1, 128>}, {pipeline_mode = #tpu.pipeline_mode<synchronous>, transform_indices = @transform_2, window_bounds = array<i64: 16, 22>}, {pipeline_mode = #tpu.pipeline_mode<synchronous>, transform_indices = @transform_3, window_bounds = array<i64: 2, 16>}, {pipeline_mode = #tpu.pipeline_mode<synchronous>, transform_indices = @transform_4, window_bounds = array<i64: 64, 16>}, {pipeline_mode = #tpu.pipeline_mode<synchronous>, transform_indices = @transform_5, window_bounds = array<i64: 32, 64>}, {pipeline_mode = #tpu.pipeline_mode<synchronous>, transform_indices = @transform_6, window_bounds = array<i64: 3, 48>}, {pipeline_mode = #tpu.pipeline_mode<synchronous>, transform_indices = @transform_7, window_bounds = array<i64: 64, 3>}, {transform_indices = @transform_8, window_bounds = array<i64: 3, 128>}]} {
    %c0 = arith.constant 0 : index
    %c0_0 = arith.constant 0 : index
    %0 = vector.load %arg1[%c0, %c0_0] : memref<128x12xf32, #tpu.memory_space<vmem>>, vector<128x12xf32>
    %c0_1 = arith.constant 0 : index
    %c0_2 = arith.constant 0 : index
    %1 = vector.load %arg2[%c0_1, %c0_2] : memref<1x128xi32, #tpu.memory_space<vmem>>, vector<1x128xi32>
    %c0_3 = arith.constant 0 : index
    %c0_4 = arith.constant 0 : index
    %2 = vector.load %arg3[%c0_3, %c0_4] : memref<16x22xf32, #tpu.memory_space<vmem>>, vector<16x22xf32>
    %3 = vector.extract_strided_slice %2 {offsets = [0, 0], sizes = [16, 12], strides = [1, 1]} : vector<16x22xf32> to vector<16x12xf32>
    %4 = vector.extract_strided_slice %2 {offsets = [0, 12], sizes = [16, 8], strides = [1, 1]} : vector<16x22xf32> to vector<16x8xf32>
    %5 = vector.extract_strided_slice %2 {offsets = [0, 20], sizes = [16, 2], strides = [1, 1]} : vector<16x22xf32> to vector<16x2xf32>
    %cst = arith.constant dense<0.000000e+00> : vector<16x128xf32>
    %6 = tpu.matmul %3, %0, %cst {dimension_numbers = #tpu.dot_dimension_numbers<[1], [1], [0], [0], [0, 0, 1, 0], [], []>} : vector<16x12xf32>, vector<128x12xf32>, vector<16x128xf32> -> vector<16x128xf32>
    %7 = tpu.iota {dimensions = array<i32: 0>} : vector<8x128xi32>
    %8 = vector.broadcast %1 : vector<1x128xi32> to vector<8x128xi32>
    %9 = arith.cmpi eq, %7, %8 : vector<8x128xi32>
    %10 = arith.extui %9 : vector<8x128xi1> to vector<8x128xi32>
    %11 = arith.sitofp %10 : vector<8x128xi32> to vector<8x128xf32>
    %cst_5 = arith.constant dense<0.000000e+00> : vector<16x128xf32>
    %12 = tpu.matmul %4, %11, %cst_5 {dimension_numbers = #tpu.dot_dimension_numbers<[1], [0], [0], [1], [0, 0, 1, 1], [], []>} : vector<16x8xf32>, vector<8x128xf32>, vector<16x128xf32> -> vector<16x128xf32>
    %13 = arith.addf %6, %12 : vector<16x128xf32>
    %c0_6 = arith.constant 0 : index
    %c0_7 = arith.constant 0 : index
    %14 = vector.load %arg4[%c0_6, %c0_7] : memref<2x16xf32, #tpu.memory_space<vmem>>, vector<2x16xf32>
    %15 = vector.extract_strided_slice %14 {offsets = [0, 0], sizes = [1, 16], strides = [1, 1]} : vector<2x16xf32> to vector<1x16xf32>
    %cst_8 = arith.constant dense<0.000000e+00> : vector<1x128xf32>
    %16 = tpu.matmul %15, %13, %cst_8 {dimension_numbers = #tpu.dot_dimension_numbers<[1], [0], [0], [1], [0, 0, 1, 1], [], []>} : vector<1x16xf32>, vector<16x128xf32>, vector<1x128xf32> -> vector<1x128xf32>
    %17 = vector.broadcast %16 : vector<1x128xf32> to vector<16x128xf32>
    %18 = arith.mulf %13, %17 : vector<16x128xf32>
    %19 = vector.extract_strided_slice %5 {offsets = [0, 0], sizes = [16, 1], strides = [1, 1]} : vector<16x2xf32> to vector<16x1xf32>
    %20 = vector.broadcast %19 : vector<16x1xf32> to vector<16x128xf32>
    %21 = arith.addf %18, %20 : vector<16x128xf32>
    %22 = arith.addf %21, %13 : vector<16x128xf32>
    %23 = vector.extract_strided_slice %14 {offsets = [1, 0], sizes = [1, 16], strides = [1, 1]} : vector<2x16xf32> to vector<1x16xf32>
    %cst_9 = arith.constant dense<0.000000e+00> : vector<1x128xf32>
    %24 = tpu.matmul %23, %22, %cst_9 {dimension_numbers = #tpu.dot_dimension_numbers<[1], [0], [0], [1], [0, 0, 1, 1], [], []>} : vector<1x16xf32>, vector<16x128xf32>, vector<1x128xf32> -> vector<1x128xf32>
    %25 = vector.broadcast %24 : vector<1x128xf32> to vector<16x128xf32>
    %26 = arith.mulf %13, %25 : vector<16x128xf32>
    %27 = vector.extract_strided_slice %5 {offsets = [0, 1], sizes = [16, 1], strides = [1, 1]} : vector<16x2xf32> to vector<16x1xf32>
    %28 = vector.broadcast %27 : vector<16x1xf32> to vector<16x128xf32>
    %29 = arith.addf %26, %28 : vector<16x128xf32>
    %30 = arith.addf %29, %22 : vector<16x128xf32>
    %c0_10 = arith.constant 0 : index
    %c0_11 = arith.constant 0 : index
    %31 = vector.load %arg8[%c0_10, %c0_11] : memref<64x3xf32, #tpu.memory_space<vmem>>, vector<64x3xf32>
    %c0_12 = arith.constant 0 : index
    %c0_13 = arith.constant 0 : index
    %32 = vector.load %arg5[%c0_12, %c0_13] : memref<64x16xf32, #tpu.memory_space<vmem>>, vector<64x16xf32>
    %cst_14 = arith.constant dense<0.000000e+00> : vector<64x128xf32>
    %33 = tpu.matmul %32, %13, %cst_14 {dimension_numbers = #tpu.dot_dimension_numbers<[1], [0], [0], [1], [0, 0, 1, 1], [], []>} : vector<64x16xf32>, vector<16x128xf32>, vector<64x128xf32> -> vector<64x128xf32>
    %34 = vector.extract_strided_slice %31 {offsets = [0, 0], sizes = [64, 1], strides = [1, 1]} : vector<64x3xf32> to vector<64x1xf32>
    %35 = vector.broadcast %34 : vector<64x1xf32> to vector<64x128xf32>
    %36 = arith.addf %33, %35 : vector<64x128xf32>
    %cst_15 = arith.constant 0.000000e+00 : f32
    %37 = vector.broadcast %cst_15 : f32 to vector<64x128xf32>
    %38 = arith.maximumf %36, %37 : vector<64x128xf32>
    %c0_16 = arith.constant 0 : index
    %c0_17 = arith.constant 0 : index
    %39 = vector.load %arg6[%c0_16, %c0_17] : memref<32x64xf32, #tpu.memory_space<vmem>>, vector<32x64xf32>
    %cst_18 = arith.constant dense<0.000000e+00> : vector<32x128xf32>
    %40 = tpu.matmul %39, %38, %cst_18 {dimension_numbers = #tpu.dot_dimension_numbers<[1], [0], [0], [1], [0, 0, 1, 1], [], []>} : vector<32x64xf32>, vector<64x128xf32>, vector<32x128xf32> -> vector<32x128xf32>
    %41 = vector.extract_strided_slice %31 {offsets = [0, 1], sizes = [32, 1], strides = [1, 1]} : vector<64x3xf32> to vector<32x1xf32>
    %42 = vector.broadcast %41 : vector<32x1xf32> to vector<32x128xf32>
    %43 = arith.addf %40, %42 : vector<32x128xf32>
    %cst_19 = arith.constant 0.000000e+00 : f32
    %44 = vector.broadcast %cst_19 : f32 to vector<32x128xf32>
    %45 = arith.maximumf %43, %44 : vector<32x128xf32>
    %c0_20 = arith.constant 0 : index
    %c0_21 = arith.constant 0 : index
    %46 = vector.load %arg7[%c0_20, %c0_21] : memref<3x48xf32, #tpu.memory_space<vmem>>, vector<3x48xf32>
    %47 = vector.extract_strided_slice %46 {offsets = [0, 0], sizes = [3, 16], strides = [1, 1]} : vector<3x48xf32> to vector<3x16xf32>
    %cst_22 = arith.constant dense<0.000000e+00> : vector<3x128xf32>
    %48 = tpu.matmul %47, %30, %cst_22 {dimension_numbers = #tpu.dot_dimension_numbers<[1], [0], [0], [1], [0, 0, 1, 1], [], []>} : vector<3x16xf32>, vector<16x128xf32>, vector<3x128xf32> -> vector<3x128xf32>
    %49 = vector.extract_strided_slice %46 {offsets = [0, 16], sizes = [3, 32], strides = [1, 1]} : vector<3x48xf32> to vector<3x32xf32>
    %cst_23 = arith.constant dense<0.000000e+00> : vector<3x128xf32>
    %50 = tpu.matmul %49, %45, %cst_23 {dimension_numbers = #tpu.dot_dimension_numbers<[1], [0], [0], [1], [0, 0, 1, 1], [], []>} : vector<3x32xf32>, vector<32x128xf32>, vector<3x128xf32> -> vector<3x128xf32>
    %51 = arith.addf %48, %50 : vector<3x128xf32>
    %52 = vector.extract_strided_slice %31 {offsets = [0, 2], sizes = [3, 1], strides = [1, 1]} : vector<64x3xf32> to vector<3x1xf32>
    %53 = vector.broadcast %52 : vector<3x1xf32> to vector<3x128xf32>
    %54 = arith.addf %51, %53 : vector<3x128xf32>
    %55 = arith.negf %54 : vector<3x128xf32>
    %56 = math.exp %55 : vector<3x128xf32>
    %cst_24 = arith.constant 1.000000e+00 : f32
    %57 = vector.broadcast %cst_24 : f32 to vector<3x128xf32>
    %58 = arith.addf %57, %56 : vector<3x128xf32>
    %59 = arith.divf %57, %58 : vector<3x128xf32>
    %c0_25 = arith.constant 0 : index
    %c0_26 = arith.constant 0 : index
    %60 = vector.load %arg9[%c0_25, %c0_26] : memref<3x128xf32, #tpu.memory_space<vmem>>, vector<3x128xf32>
    tpu.vector_store %arg9[%c0_25, %c0_26], %59 {strides = array<i32>} : memref<3x128xf32, #tpu.memory_space<vmem>>, vector<3x128xf32>,
    return
  }
  func.func @transform_0(%arg0: i32) -> (i32, i32) {
    %c0_i32 = arith.constant 0 : i32
    %c0_i32_0 = arith.constant 0 : i32
    return %arg0, %c0_i32 : i32, i32
  }
  func.func @transform_1(%arg0: i32) -> (i32, i32) {
    %c0_i32 = arith.constant 0 : i32
    %c0_i32_0 = arith.constant 0 : i32
    return %c0_i32, %arg0 : i32, i32
  }
  func.func @transform_2(%arg0: i32) -> (i32, i32) {
    %c0_i32 = arith.constant 0 : i32
    %c0_i32_0 = arith.constant 0 : i32
    %c0_i32_1 = arith.constant 0 : i32
    return %c0_i32, %c0_i32_0 : i32, i32
  }
  func.func @transform_3(%arg0: i32) -> (i32, i32) {
    %c0_i32 = arith.constant 0 : i32
    %c0_i32_0 = arith.constant 0 : i32
    %c0_i32_1 = arith.constant 0 : i32
    return %c0_i32, %c0_i32_0 : i32, i32
  }
  func.func @transform_4(%arg0: i32) -> (i32, i32) {
    %c0_i32 = arith.constant 0 : i32
    %c0_i32_0 = arith.constant 0 : i32
    %c0_i32_1 = arith.constant 0 : i32
    return %c0_i32, %c0_i32_0 : i32, i32
  }
  func.func @transform_5(%arg0: i32) -> (i32, i32) {
    %c0_i32 = arith.constant 0 : i32
    %c0_i32_0 = arith.constant 0 : i32
    %c0_i32_1 = arith.constant 0 : i32
    return %c0_i32, %c0_i32_0 : i32, i32
  }
  func.func @transform_6(%arg0: i32) -> (i32, i32) {
    %c0_i32 = arith.constant 0 : i32
    %c0_i32_0 = arith.constant 0 : i32
    %c0_i32_1 = arith.constant 0 : i32
    return %c0_i32, %c0_i32_0 : i32, i32
  }
  func.func @transform_7(%arg0: i32) -> (i32, i32) {
    %c0_i32 = arith.constant 0 : i32
    %c0_i32_0 = arith.constant 0 : i32
    %c0_i32_1 = arith.constant 0 : i32
    return %c0_i32, %c0_i32_0 : i32, i32
  }
  func.func @transform_8(%arg0: i32) -> (i32, i32) {
    %c0_i32 = arith.constant 0 : i32
    %c0_i32_0 = arith.constant 0 : i32
    return %c0_i32, %arg0 : i32, i32
  }
}

</mosaic_0001>

<llo_original>
// kernel: glideator_forward.1
$region0: #{glideator_forward.1}
  #allocation0 [shape = 'u32[]', space=smem, size = 0x4, offset = 0x4, fixed_abs, tag = 'smem constant byte address 0x4 - core index']
  #allocation1 [shape = 'u32[144,128]{1,0:T(1,128)}', space=vmem, size = 0x12000, scoped, tag = 'internal scratch']
  %s0 = inlined_call_operand.vmem [shape: f32[128,12], index: 0, kind: input, shape index: {}]
  %s1 = inlined_call_operand.vmem [shape: s32[1,128], index: 1, kind: input, shape index: {}]
  %s2 = inlined_call_operand.vmem [shape: f32[16,22], index: 2, kind: input, shape index: {}]
  %s3 = inlined_call_operand.vmem [shape: f32[2,16], index: 3, kind: input, shape index: {}]
  %s4 = inlined_call_operand.vmem [shape: f32[64,16], index: 4, kind: input, shape index: {}]
  %s5 = inlined_call_operand.vmem [shape: f32[32,64], index: 5, kind: input, shape index: {}]
  %s6 = inlined_call_operand.vmem [shape: f32[3,48], index: 6, kind: input, shape index: {}]
  %s7 = inlined_call_operand.vmem [shape: f32[64,3], index: 7, kind: input, shape index: {}]
  %s8 = inlined_call_operand.vmem [shape: f32[3,128], index: 8, kind: output, shape index: {}]
  %s9 = sld [smem:[#allocation0]]
  $region42: #{glideator_forward.1} parent=0
    _
  %s11 = ssub.s32 1, %s9
  %s12 = scalar_select 0, %s11, %s9
  // Predicated region
  $region2: #{glideator_forward.1} parent=0 // pred_check
    _
  $region3: #{glideator_forward.1} parent=0 // pred_check_branch
    %14 = sbr.rel (0) target = $region5
  $region4: #{glideator_forward.1} parent=0 // pred_region
    _
  $region5: #{glideator_forward.1} parent=0 // pred_fallthru
    _
  // Predicated region
  $region6: #{glideator_forward.1} parent=0 // pred_check
    _
  $region7: #{glideator_forward.1} parent=0 // pred_check_branch
    %16 = sbr.rel (0) target = $region9
  $region8: #{glideator_forward.1} parent=0 // pred_region
    _
  $region9: #{glideator_forward.1} parent=0 // pred_fallthru
    _
  // Predicated region
  $region10: #{glideator_forward.1} parent=0 // pred_check
    _
  $region11: #{glideator_forward.1} parent=0 // pred_check_branch
    %18 = sbr.rel (0) target = $region13
  $region12: #{glideator_forward.1} parent=0 // pred_region
    _
  $region13: #{glideator_forward.1} parent=0 // pred_fallthru
    _
  // Predicated region
  $region14: #{glideator_forward.1} parent=0 // pred_check
    _
  $region15: #{glideator_forward.1} parent=0 // pred_check_branch
    %20 = sbr.rel (0) target = $region17
  $region16: #{glideator_forward.1} parent=0 // pred_region
    _
  $region17: #{glideator_forward.1} parent=0 // pred_fallthru
    _
  // Predicated region
  $region18: #{glideator_forward.1} parent=0 // pred_check
    _
  $region19: #{glideator_forward.1} parent=0 // pred_check_branch
    %22 = sbr.rel (0) target = $region21
  $region20: #{glideator_forward.1} parent=0 // pred_region
    _
  $region21: #{glideator_forward.1} parent=0 // pred_fallthru
    _
  // Predicated region
  $region22: #{glideator_forward.1} parent=0 // pred_check
    _
  $region23: #{glideator_forward.1} parent=0 // pred_check_branch
    %24 = sbr.rel (0) target = $region25
  $region24: #{glideator_forward.1} parent=0 // pred_region
    _
  $region25: #{glideator_forward.1} parent=0 // pred_fallthru
    _
  // Predicated region
  $region26: #{glideator_forward.1} parent=0 // pred_check
    _
  $region27: #{glideator_forward.1} parent=0 // pred_check_branch
    %26 = sbr.rel (0) target = $region29
  $region28: #{glideator_forward.1} parent=0 // pred_region
    _
  $region29: #{glideator_forward.1} parent=0 // pred_fallthru
    _
  // Predicated region
  $region30: #{glideator_forward.1} parent=0 // pred_check
    _
  $region31: #{glideator_forward.1} parent=0 // pred_check_branch
    %28 = sbr.rel (0) target = $region33
  $region32: #{glideator_forward.1} parent=0 // pred_region
    _
  $region33: #{glideator_forward.1} parent=0 // pred_fallthru
    _
  %v29 = vld [vmem:[%s0] sm:$0xff]
  %v30 = vld [vmem:[%s0 + $0x8] sm:$0xff]
  %v31 = vld [vmem:[%s0 + $0x10] sm:$0xff]
  %v32 = vld [vmem:[%s0 + $0x18] sm:$0xff]
  %v33 = vld [vmem:[%s0 + $0x20] sm:$0xff]
  %v34 = vld [vmem:[%s0 + $0x28] sm:$0xff]
  %v35 = vld [vmem:[%s0 + $0x30] sm:$0xff]
  %v36 = vld [vmem:[%s0 + $0x38] sm:$0xff]
  %v37 = vld [vmem:[%s0 + $0x40] sm:$0xff]
  %v38 = vld [vmem:[%s0 + $0x48] sm:$0xff]
  %v39 = vld [vmem:[%s0 + $0x50] sm:$0xff]
  %v40 = vld [vmem:[%s0 + $0x58] sm:$0xff]
  %v41 = vld [vmem:[%s0 + $0x60] sm:$0xff]
  %v42 = vld [vmem:[%s0 + $0x68] sm:$0xff]
  %v43 = vld [vmem:[%s0 + $0x70] sm:$0xff]
  %v44 = vld [vmem:[%s0 + $0x78] sm:$0xff]
  %v45 = vld [vmem:[%s1] sm:$0x1]
  %v46 = vld [vmem:[%s2] sm:$0xff]
  %v47 = vld [vmem:[%s2 + $0x8] sm:$0xff]
  %v48 = vlaneseq
  %v49 = vshrl.u32 %v48, 7
  %v50 = vlaneseq
  %v51 = vshrl.u32 %v50, 7
  %v52 = vsub.s32 0, %v51
  %v53 = vrot.slane %v45, %v52
  %vm54 = vcmp.eq.s32.totalorder %v49, %v53
  %v55 = vsel %vm54, 1, 0
  %v56 = vcvt.s32.f32 %v55
  %59 = vrot.lane.b32.xlu0 %v46, 116
  %v60 = vpop.permute.xlu0 %59
  %61 = vrot.lane.b32.xlu0 %v47, 116
  %v62 = vpop.permute.xlu0 %61
  %vm63 = vcmask 64512
  %v64 = vsel %vm63, %v60, 0
  %v66 = vsel %vm63, %v62, 0
  %68 = vmatprep.subr.mxu0 0.0
  %69 = vmatpush1.msra.mxu0 %v56
  %70 = vmatprep.subr.mxu0 0.0
  %71 = vmatpush1.msra.mxu0 0.0
  %72 = vmatprep.subr.mxu0 0.0
  %73 = vmatpush1.msra.mxu0 0.0
  %74 = vmatprep.subr.mxu0 0.0
  %75 = vmatpush1.msra.mxu0 0.0
  %76 = vmatprep.subr.mxu0 0.0
  %77 = vmatpush1.msra.mxu0 0.0
  %78 = vmatprep.subr.mxu0 0.0
  %79 = vmatpush1.msra.mxu0 0.0
  %80 = vmatprep.subr.mxu0 0.0
  %81 = vmatpush1.msra.mxu0 0.0
  %82 = vmatprep.subr.mxu0 0.0
  %83 = vmatpush1.msra.mxu0 0.0
  %84 = vmatprep.subr.mxu0 0.0
  %85 = vmatpush1.msra.mxu0 0.0
  %86 = vmatprep.subr.mxu0 0.0
  %87 = vmatpush1.msra.mxu0 0.0
  %88 = vmatprep.subr.mxu0 0.0
  %89 = vmatpush1.msra.mxu0 0.0
  %90 = vmatprep.subr.mxu0 0.0
  %91 = vmatpush1.msra.mxu0 0.0
  %92 = vmatprep.subr.mxu0 0.0
  %93 = vmatpush1.msra.mxu0 0.0
  %94 = vmatprep.subr.mxu0 0.0
  %95 = vmatpush1.msra.mxu0 0.0
  %96 = vmatprep.subr.mxu0 0.0
  %97 = vmatpush1.msra.mxu0 0.0
  %98 = vmatprep.subr.mxu0 0.0
  %99 = vmatpush1.msra.mxu0 0.0
  %100 = vmatprep.subr.mxu0 0.0
  %101 = vmatpush1.msra.mxu0 0.0
  %102 = vmatprep.subr.mxu0 0.0
  %103 = vmatpush1.msra.mxu0 0.0
  %104 = vmatprep.subr.mxu0 0.0
  %105 = vmatpush1.msra.mxu0 0.0
  %106 = vmatprep.subr.mxu0 0.0
  %107 = vmatpush1.msra.mxu0 0.0
  %108 = vmatprep.subr.mxu0 0.0
  %109 = vmatpush1.msra.mxu0 0.0
  %110 = vmatprep.subr.mxu0 0.0
  %111 = vmatpush1.msra.mxu0 0.0
  %112 = vmatprep.subr.mxu0 0.0
  %113 = vmatpush1.msra.mxu0 0.0
  %114 = vmatprep.subr.mxu0 0.0
  %115 = vmatpush1.msra.mxu0 0.0
  %116 = vmatprep.subr.mxu0 0.0
  %117 = vmatpush1.msra.mxu0 0.0
  %118 = vmatprep.subr.mxu0 0.0
  %119 = vmatpush1.msra.mxu0 0.0
  %120 = vmatprep.subr.mxu0 0.0
  %121 = vmatpush1.msra.mxu0 0.0
  %122 = vmatprep.subr.mxu0 0.0
  %123 = vmatpush1.msra.mxu0 0.0
  %124 = vmatprep.subr.mxu0 0.0
  %125 = vmatpush1.msra.mxu0 0.0
  %126 = vmatprep.subr.mxu0 0.0
  %127 = vmatpush1.msra.mxu0 0.0
  %128 = vmatprep.subr.mxu0 0.0
  %129 = vmatpush1.msra.mxu0 0.0
  %130 = vmatprep.subr.mxu0 0.0
  %131 = vmatpush1.msra.mxu0 0.0
  %132 = vmatprep.mubr.f32.mxu0 0.0
  %133 = vmatmul.mubr.f32.gmra.mrb[0].mxu0 %v64
  %v134 = vpop.f32.mrb[0].mxu0
  %v135 = vadd.f32 0.0, %v134
  %v136 = vpop.f32.mrb[0].mxu0
  %137 = vmatprep.mubr.f32.mxu0 0.0
  %138 = vmatmul.mubr.f32.gmra.mrb[0].mxu0 %v66
  %v139 = vpop.f32.mrb[0].mxu0
  %v140 = vadd.f32 0.0, %v139
  %v141 = vpop.f32.mrb[0].mxu0
  %142 = vdwg.mxu0
  %vm143 = vcmask 97280
  %v144 = vsel %vm143, %v46, 0
  %v146 = vsel %vm143, %v47, 0
  %v149 = vsel %vm143, %v29, 0
  %v152 = vsel %vm143, %v30, 0
  %v155 = vsel %vm143, %v31, 0
  %v158 = vsel %vm143, %v32, 0
  %v161 = vsel %vm143, %v33, 0
  %v164 = vsel %vm143, %v34, 0
  %v167 = vsel %vm143, %v35, 0
  %v170 = vsel %vm143, %v36, 0
  %v173 = vsel %vm143, %v37, 0
  %v176 = vsel %vm143, %v38, 0
  %v179 = vsel %vm143, %v39, 0
  %v182 = vsel %vm143, %v40, 0
  %v185 = vsel %vm143, %v41, 0
  %v188 = vsel %vm143, %v42, 0
  %v191 = vsel %vm143, %v43, 0
  %v194 = vsel %vm143, %v44, 0
  %196 = vmatprep.subr.mxu0 0.0
  %197 = vmatpush1.xpose.msra.mxu0 %v149
  %198 = vmatprep.subr.mxu0 0.0
  %199 = vmatpush1.xpose.msra.mxu0 %v152
  %200 = vmatprep.subr.mxu0 0.0
  %201 = vmatpush1.xpose.msra.mxu0 %v155
  %202 = vmatprep.subr.mxu0 0.0
  %203 = vmatpush1.xpose.msra.mxu0 %v158
  %204 = vmatprep.subr.mxu0 0.0
  %205 = vmatpush1.xpose.msra.mxu0 %v161
  %206 = vmatprep.subr.mxu0 0.0
  %207 = vmatpush1.xpose.msra.mxu0 %v164
  %208 = vmatprep.subr.mxu0 0.0
  %209 = vmatpush1.xpose.msra.mxu0 %v167
  %210 = vmatprep.subr.mxu0 0.0
  %211 = vmatpush1.xpose.msra.mxu0 %v170
  %212 = vmatprep.subr.mxu0 0.0
  %213 = vmatpush1.xpose.msra.mxu0 %v173
  %214 = vmatprep.subr.mxu0 0.0
  %215 = vmatpush1.xpose.msra.mxu0 %v176
  %216 = vmatprep.subr.mxu0 0.0
  %217 = vmatpush1.xpose.msra.mxu0 %v179
  %218 = vmatprep.subr.mxu0 0.0
  %219 = vmatpush1.xpose.msra.mxu0 %v182
  %220 = vmatprep.subr.mxu0 0.0
  %221 = vmatpush1.xpose.msra.mxu0 %v185
  %222 = vmatprep.subr.mxu0 0.0
  %223 = vmatpush1.xpose.msra.mxu0 %v188
  %224 = vmatprep.subr.mxu0 0.0
  %225 = vmatpush1.xpose.msra.mxu0 %v191
  %226 = vmatprep.subr.mxu0 0.0
  %227 = vmatpush1.xpose.msra.mxu0 %v194
  %228 = vmatprep.subr.mxu0 0.0
  %229 = vmatpush1.xpose.msra.mxu0 0.0
  %230 = vmatprep.subr.mxu0 0.0
  %231 = vmatpush1.xpose.msra.mxu0 0.0
  %232 = vmatprep.subr.mxu0 0.0
  %233 = vmatpush1.xpose.msra.mxu0 0.0
  %234 = vmatprep.subr.mxu0 0.0
  %235 = vmatpush1.xpose.msra.mxu0 0.0
  %236 = vmatprep.subr.mxu0 0.0
  %237 = vmatpush1.xpose.msra.mxu0 0.0
  %238 = vmatprep.subr.mxu0 0.0
  %239 = vmatpush1.xpose.msra.mxu0 0.0
  %240 = vmatprep.subr.mxu0 0.0
  %241 = vmatpush1.xpose.msra.mxu0 0.0
  %242 = vmatprep.subr.mxu0 0.0
  %243 = vmatpush1.xpose.msra.mxu0 0.0
  %244 = vmatprep.subr.mxu0 0.0
  %245 = vmatpush1.xpose.msra.mxu0 0.0
  %246 = vmatprep.subr.mxu0 0.0
  %247 = vmatpush1.xpose.msra.mxu0 0.0
  %248 = vmatprep.subr.mxu0 0.0
  %249 = vmatpush1.xpose.msra.mxu0 0.0
  %250 = vmatprep.subr.mxu0 0.0
  %251 = vmatpush1.xpose.msra.mxu0 0.0
  %252 = vmatprep.subr.mxu0 0.0
  %253 = vmatpush1.xpose.msra.mxu0 0.0
  %254 = vmatprep.subr.mxu0 0.0
  %255 = vmatpush1.xpose.msra.mxu0 0.0
  %256 = vmatprep.subr.mxu0 0.0
  %257 = vmatpush1.xpose.msra.mxu0 0.0
  %258 = vmatprep.subr.mxu0 0.0
  %259 = vmatpush1.xpose.msra.mxu0 0.0
  %260 = vmatprep.mubr.f32.mxu0 0.0
  %261 = vmatmul.mubr.f32.gmra.mrb[0].mxu0 %v144
  %v262 = vpop.f32.mrb[0].mxu0
  %v263 = vadd.f32 %v135, %v262
  %v264 = vpop.f32.mrb[0].mxu0
  %265 = vmatprep.mubr.f32.mxu0 0.0
  %266 = vmatmul.mubr.f32.gmra.mrb[0].mxu0 %v146
  %v267 = vpop.f32.mrb[0].mxu0
  %v268 = vadd.f32 %v140, %v267
  %v269 = vpop.f32.mrb[0].mxu0
  %270 = vdwg.mxu0
  %v271 = vld [vmem:[%s3] sm:$0x3]
  %vm272 = vcmask 130048
  %v274 = vsel %vm272, %v271, 0
  %276 = vmatprep.subr.mxu0 0.0
  %277 = vmatpush1.msra.mxu0 %v263
  %278 = vmatprep.subr.mxu0 0.0
  %279 = vmatpush1.msra.mxu0 %v268
  %280 = vmatprep.subr.mxu0 0.0
  %281 = vmatpush1.msra.mxu0 0.0
  %282 = vmatprep.subr.mxu0 0.0
  %283 = vmatpush1.msra.mxu0 0.0
  %284 = vmatprep.subr.mxu0 0.0
  %285 = vmatpush1.msra.mxu0 0.0
  %286 = vmatprep.subr.mxu0 0.0
  %287 = vmatpush1.msra.mxu0 0.0
  %288 = vmatprep.subr.mxu0 0.0
  %289 = vmatpush1.msra.mxu0 0.0
  %290 = vmatprep.subr.mxu0 0.0
  %291 = vmatpush1.msra.mxu0 0.0
  %292 = vmatprep.subr.mxu0 0.0
  %293 = vmatpush1.msra.mxu0 0.0
  %294 = vmatprep.subr.mxu0 0.0
  %295 = vmatpush1.msra.mxu0 0.0
  %296 = vmatprep.subr.mxu0 0.0
  %297 = vmatpush1.msra.mxu0 0.0
  %298 = vmatprep.subr.mxu0 0.0
  %299 = vmatpush1.msra.mxu0 0.0
  %300 = vmatprep.subr.mxu0 0.0
  %301 = vmatpush1.msra.mxu0 0.0
  %302 = vmatprep.subr.mxu0 0.0
  %303 = vmatpush1.msra.mxu0 0.0
  %304 = vmatprep.subr.mxu0 0.0
  %305 = vmatpush1.msra.mxu0 0.0
  %306 = vmatprep.subr.mxu0 0.0
  %307 = vmatpush1.msra.mxu0 0.0
  %308 = vmatprep.subr.mxu0 0.0
  %309 = vmatpush1.msra.mxu0 0.0
  %310 = vmatprep.subr.mxu0 0.0
  %311 = vmatpush1.msra.mxu0 0.0
  %312 = vmatprep.subr.mxu0 0.0
  %313 = vmatpush1.msra.mxu0 0.0
  %314 = vmatprep.subr.mxu0 0.0
  %315 = vmatpush1.msra.mxu0 0.0
  %316 = vmatprep.subr.mxu0 0.0
  %317 = vmatpush1.msra.mxu0 0.0
  %318 = vmatprep.subr.mxu0 0.0
  %319 = vmatpush1.msra.mxu0 0.0
  %320 = vmatprep.subr.mxu0 0.0
  %321 = vmatpush1.msra.mxu0 0.0
  %322 = vmatprep.subr.mxu0 0.0
  %323 = vmatpush1.msra.mxu0 0.0
  %324 = vmatprep.subr.mxu0 0.0
  %325 = vmatpush1.msra.mxu0 0.0
  %326 = vmatprep.subr.mxu0 0.0
  %327 = vmatpush1.msra.mxu0 0.0
  %328 = vmatprep.subr.mxu0 0.0
  %329 = vmatpush1.msra.mxu0 0.0
  %330 = vmatprep.subr.mxu0 0.0
  %331 = vmatpush1.msra.mxu0 0.0
  %332 = vmatprep.subr.mxu0 0.0
  %333 = vmatpush1.msra.mxu0 0.0
  %334 = vmatprep.subr.mxu0 0.0
  %335 = vmatpush1.msra.mxu0 0.0
  %336 = vmatprep.subr.mxu0 0.0
  %337 = vmatpush1.msra.mxu0 0.0
  %338 = vmatprep.subr.mxu0 0.0
  %339 = vmatpush1.msra.mxu0 0.0
  %340 = vmatprep.mubr.f32.mxu0 0.0
  %341 = vmatmul.mubr.f32.gmra.mrb[0].mxu0 %v274
  %v342 = vpop.f32.mrb[0].mxu0
  %v343 = vadd.f32 0.0, %v342
  %v344 = vpop.f32.mrb[0].mxu0
  %345 = vdwg.mxu0
  %v346 = vlaneseq
  %v347 = vshrl.u32 %v346, 7
  %v348 = vsub.s32 0, %v347
  %v349 = vrot.slane %v343, %v348
  %v350 = vmul.f32 %v263, %v349
  %v351 = vmul.f32 %v268, %v349
  %352 = vset.pattern.permute.xlu0 20
  %353 = vperm.xlu0 %352, %v46
  %v354 = vpop.permute.xlu0 %353
  %356 = vset.pattern.permute.xlu0 20
  %357 = vperm.xlu0 %356, %v47
  %v358 = vpop.permute.xlu0 %357
  %v360 = vadd.f32 %v350, %v354
  %v361 = vadd.f32 %v351, %v358
  %v362 = vadd.f32 %v360, %v263
  %v363 = vadd.f32 %v361, %v268
  %v364 = vrot.slane %v271, 1
  %v365 = vsel %vm272, %v364, 0
  %367 = vmatprep.subr.mxu0 0.0
  %368 = vmatpush1.msra.mxu0 %v362
  %369 = vmatprep.subr.mxu0 0.0
  %370 = vmatpush1.msra.mxu0 %v363
  %371 = vmatprep.subr.mxu0 0.0
  %372 = vmatpush1.msra.mxu0 0.0
  %373 = vmatprep.subr.mxu0 0.0
  %374 = vmatpush1.msra.mxu0 0.0
  %375 = vmatprep.subr.mxu0 0.0
  %376 = vmatpush1.msra.mxu0 0.0
  %377 = vmatprep.subr.mxu0 0.0
  %378 = vmatpush1.msra.mxu0 0.0
  %379 = vmatprep.subr.mxu0 0.0
  %380 = vmatpush1.msra.mxu0 0.0
  %381 = vmatprep.subr.mxu0 0.0
  %382 = vmatpush1.msra.mxu0 0.0
  %383 = vmatprep.subr.mxu0 0.0
  %384 = vmatpush1.msra.mxu0 0.0
  %385 = vmatprep.subr.mxu0 0.0
  %386 = vmatpush1.msra.mxu0 0.0
  %387 = vmatprep.subr.mxu0 0.0
  %388 = vmatpush1.msra.mxu0 0.0
  %389 = vmatprep.subr.mxu0 0.0
  %390 = vmatpush1.msra.mxu0 0.0
  %391 = vmatprep.subr.mxu0 0.0
  %392 = vmatpush1.msra.mxu0 0.0
  %393 = vmatprep.subr.mxu0 0.0
  %394 = vmatpush1.msra.mxu0 0.0
  %395 = vmatprep.subr.mxu0 0.0
  %396 = vmatpush1.msra.mxu0 0.0
  %397 = vmatprep.subr.mxu0 0.0
  %398 = vmatpush1.msra.mxu0 0.0
  %399 = vmatprep.subr.mxu0 0.0
  %400 = vmatpush1.msra.mxu0 0.0
  %401 = vmatprep.subr.mxu0 0.0
  %402 = vmatpush1.msra.mxu0 0.0
  %403 = vmatprep.subr.mxu0 0.0
  %404 = vmatpush1.msra.mxu0 0.0
  %405 = vmatprep.subr.mxu0 0.0
  %406 = vmatpush1.msra.mxu0 0.0
  %407 = vmatprep.subr.mxu0 0.0
  %408 = vmatpush1.msra.mxu0 0.0
  %409 = vmatprep.subr.mxu0 0.0
  %410 = vmatpush1.msra.mxu0 0.0
  %411 = vmatprep.subr.mxu0 0.0
  %412 = vmatpush1.msra.mxu0 0.0
  %413 = vmatprep.subr.mxu0 0.0
  %414 = vmatpush1.msra.mxu0 0.0
  %415 = vmatprep.subr.mxu0 0.0
  %416 = vmatpush1.msra.mxu0 0.0
  %417 = vmatprep.subr.mxu0 0.0
  %418 = vmatpush1.msra.mxu0 0.0
  %419 = vmatprep.subr.mxu0 0.0
  %420 = vmatpush1.msra.mxu0 0.0
  %421 = vmatprep.subr.mxu0 0.0
  %422 = vmatpush1.msra.mxu0 0.0
  %423 = vmatprep.subr.mxu0 0.0
  %424 = vmatpush1.msra.mxu0 0.0
  %425 = vmatprep.subr.mxu0 0.0
  %426 = vmatpush1.msra.mxu0 0.0
  %427 = vmatprep.subr.mxu0 0.0
  %428 = vmatpush1.msra.mxu0 0.0
  %429 = vmatprep.subr.mxu0 0.0
  %430 = vmatpush1.msra.mxu0 0.0
  %431 = vmatprep.mubr.f32.mxu0 0.0
  %432 = vmatmul.mubr.f32.gmra.mrb[0].mxu0 %v365
  %v433 = vpop.f32.mrb[0].mxu0
  %v434 = vadd.f32 0.0, %v433
  %v435 = vpop.f32.mrb[0].mxu0
  %436 = vdwg.mxu0
  %v437 = vlaneseq
  %v438 = vshrl.u32 %v437, 7
  %v439 = vsub.s32 0, %v438
  %v440 = vrot.slane %v434, %v439
  %v441 = vmul.f32 %v263, %v440
  %v442 = vmul.f32 %v268, %v440
  %443 = vset.pattern.permute.xlu0 21
  %444 = vperm.xlu0 %443, %v46
  %v445 = vpop.permute.xlu0 %444
  %447 = vset.pattern.permute.xlu0 21
  %448 = vperm.xlu0 %447, %v47
  %v449 = vpop.permute.xlu0 %448
  %v451 = vadd.f32 %v441, %v445
  %v452 = vadd.f32 %v442, %v449
  %v453 = vadd.f32 %v451, %v362
  %v454 = vadd.f32 %v452, %v363
  %v455 = vld [vmem:[%s7] sm:$0xff]
  %v456 = vld [vmem:[%s7 + $0x8] sm:$0xff]
  %v457 = vld [vmem:[%s7 + $0x10] sm:$0xff]
  %v458 = vld [vmem:[%s7 + $0x18] sm:$0xff]
  %v459 = vld [vmem:[%s7 + $0x20] sm:$0xff]
  %v460 = vld [vmem:[%s7 + $0x28] sm:$0xff]
  %v461 = vld [vmem:[%s7 + $0x30] sm:$0xff]
  %v462 = vld [vmem:[%s7 + $0x38] sm:$0xff]
  %v463 = vld [vmem:[%s4] sm:$0xff]
  %v464 = vld [vmem:[%s4 + $0x8] sm:$0xff]
  %v465 = vld [vmem:[%s4 + $0x10] sm:$0xff]
  %v466 = vld [vmem:[%s4 + $0x18] sm:$0xff]
  %v467 = vld [vmem:[%s4 + $0x20] sm:$0xff]
  %v468 = vld [vmem:[%s4 + $0x28] sm:$0xff]
  %v469 = vld [vmem:[%s4 + $0x30] sm:$0xff]
  %v470 = vld [vmem:[%s4 + $0x38] sm:$0xff]
  %472 = vset.pattern.permute.xlu0 0
  %473 = vperm.xlu0 %472, %v455
  %v474 = vpop.permute.xlu0 %473
  %477 = vset.pattern.permute.xlu0 0
  %478 = vperm.xlu0 %477, %v456
  %v479 = vpop.permute.xlu0 %478
  %482 = vset.pattern.permute.xlu0 0
  %483 = vperm.xlu0 %482, %v457
  %v484 = vpop.permute.xlu0 %483
  %487 = vset.pattern.permute.xlu0 0
  %488 = vperm.xlu0 %487, %v458
  %v489 = vpop.permute.xlu0 %488
  %492 = vset.pattern.permute.xlu0 0
  %493 = vperm.xlu0 %492, %v459
  %v494 = vpop.permute.xlu0 %493
  %497 = vset.pattern.permute.xlu0 0
  %498 = vperm.xlu0 %497, %v460
  %v499 = vpop.permute.xlu0 %498
  %502 = vset.pattern.permute.xlu0 0
  %503 = vperm.xlu0 %502, %v461
  %v504 = vpop.permute.xlu0 %503
  %507 = vset.pattern.permute.xlu0 0
  %508 = vperm.xlu0 %507, %v462
  %v509 = vpop.permute.xlu0 %508
  %v512 = vsel %vm272, %v463, 0
  %v515 = vsel %vm272, %v464, 0
  %v518 = vsel %vm272, %v465, 0
  %v521 = vsel %vm272, %v466, 0
  %v524 = vsel %vm272, %v467, 0
  %v527 = vsel %vm272, %v468, 0
  %v530 = vsel %vm272, %v469, 0
  %v533 = vsel %vm272, %v470, 0
  %535 = vmatprep.subr.mxu0 0.0
  %536 = vmatpush1.msra.mxu0 %v263
  %537 = vmatprep.subr.mxu0 0.0
  %538 = vmatpush1.msra.mxu0 %v268
  %539 = vmatprep.subr.mxu0 0.0
  %540 = vmatpush1.msra.mxu0 0.0
  %541 = vmatprep.subr.mxu0 0.0
  %542 = vmatpush1.msra.mxu0 0.0
  %543 = vmatprep.subr.mxu0 0.0
  %544 = vmatpush1.msra.mxu0 0.0
  %545 = vmatprep.subr.mxu0 0.0
  %546 = vmatpush1.msra.mxu0 0.0
  %547 = vmatprep.subr.mxu0 0.0
  %548 = vmatpush1.msra.mxu0 0.0
  %549 = vmatprep.subr.mxu0 0.0
  %550 = vmatpush1.msra.mxu0 0.0
  %551 = vmatprep.subr.mxu0 0.0
  %552 = vmatpush1.msra.mxu0 0.0
  %553 = vmatprep.subr.mxu0 0.0
  %554 = vmatpush1.msra.mxu0 0.0
  %555 = vmatprep.subr.mxu0 0.0
  %556 = vmatpush1.msra.mxu0 0.0
  %557 = vmatprep.subr.mxu0 0.0
  %558 = vmatpush1.msra.mxu0 0.0
  %559 = vmatprep.subr.mxu0 0.0
  %560 = vmatpush1.msra.mxu0 0.0
  %561 = vmatprep.subr.mxu0 0.0
  %562 = vmatpush1.msra.mxu0 0.0
  %563 = vmatprep.subr.mxu0 0.0
  %564 = vmatpush1.msra.mxu0 0.0
  %565 = vmatprep.subr.mxu0 0.0
  %566 = vmatpush1.msra.mxu0 0.0
  %567 = vmatprep.subr.mxu0 0.0
  %568 = vmatpush1.msra.mxu0 0.0
  %569 = vmatprep.subr.mxu0 0.0
  %570 = vmatpush1.msra.mxu0 0.0
  %571 = vmatprep.subr.mxu0 0.0
  %572 = vmatpush1.msra.mxu0 0.0
  %573 = vmatprep.subr.mxu0 0.0
  %574 = vmatpush1.msra.mxu0 0.0
  %575 = vmatprep.subr.mxu0 0.0
  %576 = vmatpush1.msra.mxu0 0.0
  %577 = vmatprep.subr.mxu0 0.0
  %578 = vmatpush1.msra.mxu0 0.0
  %579 = vmatprep.subr.mxu0 0.0
  %580 = vmatpush1.msra.mxu0 0.0
  %581 = vmatprep.subr.mxu0 0.0
  %582 = vmatpush1.msra.mxu0 0.0
  %583 = vmatprep.subr.mxu0 0.0
  %584 = vmatpush1.msra.mxu0 0.0
  %585 = vmatprep.subr.mxu0 0.0
  %586 = vmatpush1.msra.mxu0 0.0
  %587 = vmatprep.subr.mxu0 0.0
  %588 = vmatpush1.msra.mxu0 0.0
  %589 = vmatprep.subr.mxu0 0.0
  %590 = vmatpush1.msra.mxu0 0.0
  %591 = vmatprep.subr.mxu0 0.0
  %592 = vmatpush1.msra.mxu0 0.0
  %593 = vmatprep.subr.mxu0 0.0
  %594 = vmatpush1.msra.mxu0 0.0
  %595 = vmatprep.subr.mxu0 0.0
  %596 = vmatpush1.msra.mxu0 0.0
  %597 = vmatprep.subr.mxu0 0.0
  %598 = vmatpush1.msra.mxu0 0.0
  %599 = vmatprep.mubr.f32.mxu0 0.0
  %600 = vmatmul.mubr.f32.gmra.mrb[0].mxu0 %v512
  %v601 = vpop.f32.mrb[0].mxu0
  %v602 = vadd.f32 %v474, %v601
  %v603 = vpop.f32.mrb[0].mxu0
  %604 = vmatprep.mubr.f32.mxu0 0.0
  %605 = vmatmul.mubr.f32.gmra.mrb[0].mxu0 %v515
  %v606 = vpop.f32.mrb[0].mxu0
  %v607 = vadd.f32 %v479, %v606
  %v608 = vpop.f32.mrb[0].mxu0
  %609 = vmatprep.mubr.f32.mxu0 0.0
  %610 = vmatmul.mubr.f32.gmra.mrb[0].mxu0 %v518
  %v611 = vpop.f32.mrb[0].mxu0
  %v612 = vadd.f32 %v484, %v611
  %v613 = vpop.f32.mrb[0].mxu0
  %614 = vmatprep.mubr.f32.mxu0 0.0
  %615 = vmatmul.mubr.f32.gmra.mrb[0].mxu0 %v521
  %v616 = vpop.f32.mrb[0].mxu0
  %v617 = vadd.f32 %v489, %v616
  %v618 = vpop.f32.mrb[0].mxu0
  %619 = vmatprep.mubr.f32.mxu0 0.0
  %620 = vmatmul.mubr.f32.gmra.mrb[0].mxu0 %v524
  %v621 = vpop.f32.mrb[0].mxu0
  %v622 = vadd.f32 %v494, %v621
  %v623 = vpop.f32.mrb[0].mxu0
  %624 = vmatprep.mubr.f32.mxu0 0.0
  %625 = vmatmul.mubr.f32.gmra.mrb[0].mxu0 %v527
  %v626 = vpop.f32.mrb[0].mxu0
  %v627 = vadd.f32 %v499, %v626
  %v628 = vpop.f32.mrb[0].mxu0
  %629 = vmatprep.mubr.f32.mxu0 0.0
  %630 = vmatmul.mubr.f32.gmra.mrb[0].mxu0 %v530
  %v631 = vpop.f32.mrb[0].mxu0
  %v632 = vadd.f32 %v504, %v631
  %v633 = vpop.f32.mrb[0].mxu0
  %634 = vmatprep.mubr.f32.mxu0 0.0
  %635 = vmatmul.mubr.f32.gmra.mrb[0].mxu0 %v533
  %v636 = vpop.f32.mrb[0].mxu0
  %v637 = vadd.f32 %v509, %v636
  %v638 = vpop.f32.mrb[0].mxu0
  %639 = vdwg.mxu0
  %v640 = vmax.f32 %v602, 0.0
  %v641 = vmax.f32 %v607, 0.0
  %v642 = vmax.f32 %v612, 0.0
  %v643 = vmax.f32 %v617, 0.0
  %v644 = vmax.f32 %v622, 0.0
  %v645 = vmax.f32 %v627, 0.0
  %v646 = vmax.f32 %v632, 0.0
  %v647 = vmax.f32 %v637, 0.0
  %v648 = vld [vmem:[%s5] sm:$0xff]
  %v649 = vld [vmem:[%s5 + $0x8] sm:$0xff]
  %v650 = vld [vmem:[%s5 + $0x10] sm:$0xff]
  %v651 = vld [vmem:[%s5 + $0x18] sm:$0xff]
  %652 = vset.pattern.permute.xlu0 1
  %653 = vperm.xlu0 %652, %v455
  %v654 = vpop.permute.xlu0 %653
  %656 = vset.pattern.permute.xlu0 1
  %657 = vperm.xlu0 %656, %v456
  %v658 = vpop.permute.xlu0 %657
  %660 = vset.pattern.permute.xlu0 1
  %661 = vperm.xlu0 %660, %v457
  %v662 = vpop.permute.xlu0 %661
  %664 = vset.pattern.permute.xlu0 1
  %665 = vperm.xlu0 %664, %v458
  %v666 = vpop.permute.xlu0 %665
  %vm668 = vcmask 523264
  %v670 = vsel %vm668, %v648, 0
  %v673 = vsel %vm668, %v649, 0
  %v676 = vsel %vm668, %v650, 0
  %v679 = vsel %vm668, %v651, 0
  %681 = vmatprep.subr.mxu0 0.0
  %682 = vmatpush1.msra.mxu0 %v640
  %683 = vmatprep.subr.mxu0 0.0
  %684 = vmatpush1.msra.mxu0 %v641
  %685 = vmatprep.subr.mxu0 0.0
  %686 = vmatpush1.msra.mxu0 %v642
  %687 = vmatprep.subr.mxu0 0.0
  %688 = vmatpush1.msra.mxu0 %v643
  %689 = vmatprep.subr.mxu0 0.0
  %690 = vmatpush1.msra.mxu0 %v644
  %691 = vmatprep.subr.mxu0 0.0
  %692 = vmatpush1.msra.mxu0 %v645
  %693 = vmatprep.subr.mxu0 0.0
  %694 = vmatpush1.msra.mxu0 %v646
  %695 = vmatprep.subr.mxu0 0.0
  %696 = vmatpush1.msra.mxu0 %v647
  %697 = vmatprep.subr.mxu0 0.0
  %698 = vmatpush1.msra.mxu0 0.0
  %699 = vmatprep.subr.mxu0 0.0
  %700 = vmatpush1.msra.mxu0 0.0
  %701 = vmatprep.subr.mxu0 0.0
  %702 = vmatpush1.msra.mxu0 0.0
  %703 = vmatprep.subr.mxu0 0.0
  %704 = vmatpush1.msra.mxu0 0.0
  %705 = vmatprep.subr.mxu0 0.0
  %706 = vmatpush1.msra.mxu0 0.0
  %707 = vmatprep.subr.mxu0 0.0
  %708 = vmatpush1.msra.mxu0 0.0
  %709 = vmatprep.subr.mxu0 0.0
  %710 = vmatpush1.msra.mxu0 0.0
  %711 = vmatprep.subr.mxu0 0.0
  %712 = vmatpush1.msra.mxu0 0.0
  %713 = vmatprep.subr.mxu0 0.0
  %714 = vmatpush1.msra.mxu0 0.0
  %715 = vmatprep.subr.mxu0 0.0
  %716 = vmatpush1.msra.mxu0 0.0
  %717 = vmatprep.subr.mxu0 0.0
  %718 = vmatpush1.msra.mxu0 0.0
  %719 = vmatprep.subr.mxu0 0.0
  %720 = vmatpush1.msra.mxu0 0.0
  %721 = vmatprep.subr.mxu0 0.0
  %722 = vmatpush1.msra.mxu0 0.0
  %723 = vmatprep.subr.mxu0 0.0
  %724 = vmatpush1.msra.mxu0 0.0
  %725 = vmatprep.subr.mxu0 0.0
  %726 = vmatpush1.msra.mxu0 0.0
  %727 = vmatprep.subr.mxu0 0.0
  %728 = vmatpush1.msra.mxu0 0.0
  %729 = vmatprep.subr.mxu0 0.0
  %730 = vmatpush1.msra.mxu0 0.0
  %731 = vmatprep.subr.mxu0 0.0
  %732 = vmatpush1.msra.mxu0 0.0
  %733 = vmatprep.subr.mxu0 0.0
  %734 = vmatpush1.msra.mxu0 0.0
  %735 = vmatprep.subr.mxu0 0.0
  %736 = vmatpush1.msra.mxu0 0.0
  %737 = vmatprep.subr.mxu0 0.0
  %738 = vmatpush1.msra.mxu0 0.0
  %739 = vmatprep.subr.mxu0 0.0
  %740 = vmatpush1.msra.mxu0 0.0
  %741 = vmatprep.subr.mxu0 0.0
  %742 = vmatpush1.msra.mxu0 0.0
  %743 = vmatprep.subr.mxu0 0.0
  %744 = vmatpush1.msra.mxu0 0.0
  %745 = vmatprep.mubr.f32.mxu0 0.0
  %746 = vmatmul.mubr.f32.gmra.mrb[0].mxu0 %v670
  %v747 = vpop.f32.mrb[0].mxu0
  %v748 = vadd.f32 %v654, %v747
  %v749 = vpop.f32.mrb[0].mxu0
  %750 = vmatprep.mubr.f32.mxu0 0.0
  %751 = vmatmul.mubr.f32.gmra.mrb[0].mxu0 %v673
  %v752 = vpop.f32.mrb[0].mxu0
  %v753 = vadd.f32 %v658, %v752
  %v754 = vpop.f32.mrb[0].mxu0
  %755 = vmatprep.mubr.f32.mxu0 0.0
  %756 = vmatmul.mubr.f32.gmra.mrb[0].mxu0 %v676
  %v757 = vpop.f32.mrb[0].mxu0
  %v758 = vadd.f32 %v662, %v757
  %v759 = vpop.f32.mrb[0].mxu0
  %760 = vmatprep.mubr.f32.mxu0 0.0
  %761 = vmatmul.mubr.f32.gmra.mrb[0].mxu0 %v679
  %v762 = vpop.f32.mrb[0].mxu0
  %v763 = vadd.f32 %v666, %v762
  %v764 = vpop.f32.mrb[0].mxu0
  %765 = vdwg.mxu0
  %v766 = vmax.f32 %v748, 0.0
  %v767 = vmax.f32 %v753, 0.0
  %v768 = vmax.f32 %v758, 0.0
  %v769 = vmax.f32 %v763, 0.0
  %v770 = vld [vmem:[%s6] sm:$0x7]
  %772 = vrot.lane.b32.xlu0 %v770, 112
  %v773 = vpop.permute.xlu0 %772
  %vm774 = vcmask 261120
  %v775 = vsel %vm774, %v773, 0
  %777 = vmatprep.subr.mxu0 0.0
  %778 = vmatpush1.msra.mxu0 %v766
  %779 = vmatprep.subr.mxu0 0.0
  %780 = vmatpush1.msra.mxu0 %v767
  %781 = vmatprep.subr.mxu0 0.0
  %782 = vmatpush1.msra.mxu0 %v768
  %783 = vmatprep.subr.mxu0 0.0
  %784 = vmatpush1.msra.mxu0 %v769
  %785 = vmatprep.subr.mxu0 0.0
  %786 = vmatpush1.msra.mxu0 0.0
  %787 = vmatprep.subr.mxu0 0.0
  %788 = vmatpush1.msra.mxu0 0.0
  %789 = vmatprep.subr.mxu0 0.0
  %790 = vmatpush1.msra.mxu0 0.0
  %791 = vmatprep.subr.mxu0 0.0
  %792 = vmatpush1.msra.mxu0 0.0
  %793 = vmatprep.subr.mxu0 0.0
  %794 = vmatpush1.msra.mxu0 0.0
  %795 = vmatprep.subr.mxu0 0.0
  %796 = vmatpush1.msra.mxu0 0.0
  %797 = vmatprep.subr.mxu0 0.0
  %798 = vmatpush1.msra.mxu0 0.0
  %799 = vmatprep.subr.mxu0 0.0
  %800 = vmatpush1.msra.mxu0 0.0
  %801 = vmatprep.subr.mxu0 0.0
  %802 = vmatpush1.msra.mxu0 0.0
  %803 = vmatprep.subr.mxu0 0.0
  %804 = vmatpush1.msra.mxu0 0.0
  %805 = vmatprep.subr.mxu0 0.0
  %806 = vmatpush1.msra.mxu0 0.0
  %807 = vmatprep.subr.mxu0 0.0
  %808 = vmatpush1.msra.mxu0 0.0
  %809 = vmatprep.subr.mxu0 0.0
  %810 = vmatpush1.msra.mxu0 0.0
  %811 = vmatprep.subr.mxu0 0.0
  %812 = vmatpush1.msra.mxu0 0.0
  %813 = vmatprep.subr.mxu0 0.0
  %814 = vmatpush1.msra.mxu0 0.0
  %815 = vmatprep.subr.mxu0 0.0
  %816 = vmatpush1.msra.mxu0 0.0
  %817 = vmatprep.subr.mxu0 0.0
  %818 = vmatpush1.msra.mxu0 0.0
  %819 = vmatprep.subr.mxu0 0.0
  %820 = vmatpush1.msra.mxu0 0.0
  %821 = vmatprep.subr.mxu0 0.0
  %822 = vmatpush1.msra.mxu0 0.0
  %823 = vmatprep.subr.mxu0 0.0
  %824 = vmatpush1.msra.mxu0 0.0
  %825 = vmatprep.subr.mxu0 0.0
  %826 = vmatpush1.msra.mxu0 0.0
  %827 = vmatprep.subr.mxu0 0.0
  %828 = vmatpush1.msra.mxu0 0.0
  %829 = vmatprep.subr.mxu0 0.0
  %830 = vmatpush1.msra.mxu0 0.0
  %831 = vmatprep.subr.mxu0 0.0
  %832 = vmatpush1.msra.mxu0 0.0
  %833 = vmatprep.subr.mxu0 0.0
  %834 = vmatpush1.msra.mxu0 0.0
  %835 = vmatprep.subr.mxu0 0.0
  %836 = vmatpush1.msra.mxu0 0.0
  %837 = vmatprep.subr.mxu0 0.0
  %838 = vmatpush1.msra.mxu0 0.0
  %839 = vmatprep.subr.mxu0 0.0
  %840 = vmatpush1.msra.mxu0 0.0
  %841 = vmatprep.mubr.f32.mxu0 0.0
  %842 = vmatmul.mubr.f32.gmra.mrb[0].mxu0 %v775
  %v843 = vpop.f32.mrb[0].mxu0
  %v844 = vadd.f32 0.0, %v843
  %v845 = vpop.f32.mrb[0].mxu0
  %846 = vdwg.mxu0
  %v847 = vsel %vm272, %v770, 0
  %849 = vmatprep.subr.mxu0 0.0
  %850 = vmatpush1.msra.mxu0 %v453
  %851 = vmatprep.subr.mxu0 0.0
  %852 = vmatpush1.msra.mxu0 %v454
  %853 = vmatprep.subr.mxu0 0.0
  %854 = vmatpush1.msra.mxu0 0.0
  %855 = vmatprep.subr.mxu0 0.0
  %856 = vmatpush1.msra.mxu0 0.0
  %857 = vmatprep.subr.mxu0 0.0
  %858 = vmatpush1.msra.mxu0 0.0
  %859 = vmatprep.subr.mxu0 0.0
  %860 = vmatpush1.msra.mxu0 0.0
  %861 = vmatprep.subr.mxu0 0.0
  %862 = vmatpush1.msra.mxu0 0.0
  %863 = vmatprep.subr.mxu0 0.0
  %864 = vmatpush1.msra.mxu0 0.0
  %865 = vmatprep.subr.mxu0 0.0
  %866 = vmatpush1.msra.mxu0 0.0
  %867 = vmatprep.subr.mxu0 0.0
  %868 = vmatpush1.msra.mxu0 0.0
  %869 = vmatprep.subr.mxu0 0.0
  %870 = vmatpush1.msra.mxu0 0.0
  %871 = vmatprep.subr.mxu0 0.0
  %872 = vmatpush1.msra.mxu0 0.0
  %873 = vmatprep.subr.mxu0 0.0
  %874 = vmatpush1.msra.mxu0 0.0
  %875 = vmatprep.subr.mxu0 0.0
  %876 = vmatpush1.msra.mxu0 0.0
  %877 = vmatprep.subr.mxu0 0.0
  %878 = vmatpush1.msra.mxu0 0.0
  %879 = vmatprep.subr.mxu0 0.0
  %880 = vmatpush1.msra.mxu0 0.0
  %881 = vmatprep.subr.mxu0 0.0
  %882 = vmatpush1.msra.mxu0 0.0
  %883 = vmatprep.subr.mxu0 0.0
  %884 = vmatpush1.msra.mxu0 0.0
  %885 = vmatprep.subr.mxu0 0.0
  %886 = vmatpush1.msra.mxu0 0.0
  %887 = vmatprep.subr.mxu0 0.0
  %888 = vmatpush1.msra.mxu0 0.0
  %889 = vmatprep.subr.mxu0 0.0
  %890 = vmatpush1.msra.mxu0 0.0
  %891 = vmatprep.subr.mxu0 0.0
  %892 = vmatpush1.msra.mxu0 0.0
  %893 = vmatprep.subr.mxu0 0.0
  %894 = vmatpush1.msra.mxu0 0.0
  %895 = vmatprep.subr.mxu0 0.0
  %896 = vmatpush1.msra.mxu0 0.0
  %897 = vmatprep.subr.mxu0 0.0
  %898 = vmatpush1.msra.mxu0 0.0
  %899 = vmatprep.subr.mxu0 0.0
  %900 = vmatpush1.msra.mxu0 0.0
  %901 = vmatprep.subr.mxu0 0.0
  %902 = vmatpush1.msra.mxu0 0.0
  %903 = vmatprep.subr.mxu0 0.0
  %904 = vmatpush1.msra.mxu0 0.0
  %905 = vmatprep.subr.mxu0 0.0
  %906 = vmatpush1.msra.mxu0 0.0
  %907 = vmatprep.subr.mxu0 0.0
  %908 = vmatpush1.msra.mxu0 0.0
  %909 = vmatprep.subr.mxu0 0.0
  %910 = vmatpush1.msra.mxu0 0.0
  %911 = vmatprep.subr.mxu0 0.0
  %912 = vmatpush1.msra.mxu0 0.0
  %913 = vmatprep.mubr.f32.mxu0 0.0
  %914 = vmatmul.mubr.f32.gmra.mrb[0].mxu0 %v847
  %v915 = vpop.f32.mrb[0].mxu0
  %v916 = vadd.f32 %v844, %v915
  %v917 = vpop.f32.mrb[0].mxu0
  %918 = vdwg.mxu0
  %919 = vset.pattern.permute.xlu0 2
  %920 = vperm.xlu0 %919, %v455
  %v921 = vpop.permute.xlu0 %920
  %v923 = vadd.f32 %v916, %v921
  %v924 = vxor.u32 %v923, 2147483648
  %v925 = vmul.f32 %v924, 1.442695
  %v926 = vpow.pop %v925
  %v927 = vadd.f32 %v926, 1.0
  %v928 = vrcp.pop %v927
  %v929 = vmul.f32 1.0, %v928
  %930 = vst [vmem:[%s8] sm:$0x7] %v929
  // Predicated region
  $region34: #{glideator_forward.1} parent=0 // pred_check
    _
  $region35: #{glideator_forward.1} parent=0 // pred_check_branch
    %932 = sbr.rel (0) target = $region37
  $region36: #{glideator_forward.1} parent=0 // pred_region
    _
  $region37: #{glideator_forward.1} parent=0 // pred_fallthru
    _
  // Predicated region
  $region38: #{glideator_forward.1} parent=0 // pred_check
    _
  $region39: #{glideator_forward.1} parent=0 // pred_check_branch
    %934 = sbr.rel (0) target = $region41
  $region40: #{glideator_forward.1} parent=0 // pred_region
    _
  $region41: #{glideator_forward.1} parent=0 // pred_fallthru
    _

</llo_original>
